<compile_context>
chip_gen: v7x
topology: tpu7x:2x2x1
jax: 0.10.0
libtpu: 0.0.40
codegen_flags: <defaults>
</compile_context>

<pallas_src>
import math

import jax
import jax.numpy as jnp
from jax.experimental import pallas as pl
from jax.experimental.pallas import tpu as pltpu


def _gpool_kernel(x_ref, msum_ref, o_ref):
    # x_ref:    (R, HW)  one row per (batch, channel) pair, any float dtype
    # msum_ref: (R, 1)   mask_sum_hw broadcast per row (f32)
    # o_ref:    (R, 3)   columns: [mean, mean*scale2, mean*scale3] (f32)
    row_sum = jnp.sum(x_ref[...], axis=-1, keepdims=True, dtype=jnp.float32)
    msum = msum_ref[...]
    layer_mean = row_sum / msum            # exact divide (matches spec numerics)

    sqrt_off = jnp.sqrt(msum) - 14.0       # (R, 1)
    scale2 = sqrt_off * 0.1
    scale3 = sqrt_off * sqrt_off * 0.01 - 0.1

    # Build the (R, 3) block with a lane select instead of concatenate: one
    # masked store per 8 rows, no reshape/relayout of the reduction result.
    col = jax.lax.broadcasted_iota(jnp.int32, o_ref.shape, 1)        # 0,1,2
    scale = jnp.where(col == 0, 1.0, jnp.where(col == 1, scale2, scale3))
    o_ref[...] = (layer_mean * scale).astype(o_ref.dtype)


def _chip_params():
    """Per-generation knobs: TensorCores sharing the grid, per-buffer x-tile
    budget, and the scoped-VMEM limit to request (None = leave the default)."""
    mib = 1024 * 1024
    kind = ""
    try:
        kind = jax.devices()[0].device_kind.lower()
    except Exception:
        pass
    if "v7" in kind or "7x" in kind:
        # 2 TensorCores / chip, 64 MiB physical VMEM per core.
        return dict(num_cores=2, budget_bytes=8 * mib, vmem_limit_bytes=48 * mib)
    if "v6" in kind:
        return dict(num_cores=1, budget_bytes=8 * mib, vmem_limit_bytes=64 * mib)
    if "v5" in kind and ("lite" in kind or "v5e" in kind):
        return dict(num_cores=1, budget_bytes=8 * mib, vmem_limit_bytes=64 * mib)
    if "v5" in kind or "v4" in kind:
        # v4 / v5p megacore: 2 TensorCores split the "parallel" grid axis.
        return dict(num_cores=2, budget_bytes=8 * mib, vmem_limit_bytes=64 * mib)
    # Unknown / older generation: stay under the 16 MiB scoped-VMEM default.
    return dict(num_cores=1, budget_bytes=2 * mib, vmem_limit_bytes=None)


def _choose_batch_tile(n, c, hw, itemsize, num_cores, budget_bytes):
    """Batch rows per grid step (the x tile is (tb*c, hw)).  Keeps tb*c a
    multiple of 8 (or tb == n), never requires padding x in HBM, and balances
    the step count across TensorCores on megacore chips."""
    a = 8 // math.gcd(c, 8)                 # tb granularity so tb*c % 8 == 0
    hw_pad = -(-hw // 128) * 128            # lane padding of the VMEM tile
    # Per-batch-row footprint of ONE pipeline buffer: x rows + lane-padded
    # (tb*c, 3) output tile + mask_sum rows.  (Pallas double-buffers on top.)
    per_row = max(1, c * (hw_pad * itemsize + 128 * 4 + 4))
    budget_rows = max(a, int(budget_bytes) // per_row)

    if n <= a:
        return n
    if num_cores <= 1 and n <= budget_rows:
        return n                            # whole batch in one maximal tile

    tb = min(budget_rows, n)
    if num_cores > 1:
        tb = min(tb, max(a, n // num_cores))    # at least num_cores steps
    tb = max(a, (tb // a) * a)
    if tb >= n:
        return n

    if num_cores > 1:
        # Balance: round the step count up to a multiple of the core count.
        steps = -(-n // tb)
        steps = -(-steps // num_cores) * num_cores
        tb = max(a, (-(-n // steps) + a - 1) // a * a)
        if tb >= n:
            return n

    # Prefer an exact divisor of n (no ragged last block) close to the tile.
    d = tb
    floor_d = max(a, (3 * tb) // 4)
    while d >= floor_d:
        if n % d == 0:
            return d
        d -= a
    return tb


def kata_value_head_gpool(x, mask, mask_sum_hw, *, batch_tile=None):
    """Pallas implementation of KataValueHeadGPool.forward.

    x:           (N, C, H, W)  float (f32 or bf16)
    mask:        (N, 1, H, W)  unused by the forward pass (kept for parity)
    mask_sum_hw: (N, 1, 1, 1)  float
    Returns:     (N, 3*C, 1, 1) float32
    """
    del mask  # not used by KataValueHeadGPool.forward
    n, c, h, w = x.shape
    hw = h * w

    x2 = x.reshape(n * c, hw)                     # free: contiguous reshape
    msum_rows = jnp.broadcast_to(
        mask_sum_hw.reshape(n, 1, 1).astype(jnp.float32), (n, c, 1)
    ).reshape(n * c, 1)                           # tiny (N*C floats)

    params = _chip_params()
    if batch_tile is None:
        tb = _choose_batch_tile(n, c, hw, x.dtype.itemsize,
                                params["num_cores"], params["budget_bytes"])
    else:
        tb = int(batch_tile)
        if tb >= n:
            tb = n
        else:
            a = 8 // math.gcd(c, 8)
            tb = max(a, (tb // a) * a)

    r = tb * c
    steps = -(-n // tb)

    ck = dict(dimension_semantics=("parallel",))
    if params["vmem_limit_bytes"]:
        ck["vmem_limit_bytes"] = params["vmem_limit_bytes"]

    cost = pl.CostEstimate(
        flops=2 * n * c * hw + 8 * n * c,
        transcendentals=n * c,
        bytes_accessed=(x2.size * x2.dtype.itemsize
                        + msum_rows.size * 4 + n * c * 3 * 4),
    )

    out2 = pl.pallas_call(
        _gpool_kernel,
        out_shape=jax.ShapeDtypeStruct((n * c, 3), jnp.float32),
        grid_spec=pltpu.PrefetchScalarGridSpec(
            num_scalar_prefetch=0,
            grid=(steps,),
            in_specs=[
                pl.BlockSpec((r, hw), lambda i: (i, 0)),   # x rows
                pl.BlockSpec((r, 1), lambda i: (i, 0)),    # mask_sum per row
            ],
            out_specs=pl.BlockSpec((r, 3), lambda i: (i, 0)),
        ),
        compiler_params=pltpu.CompilerParams(**ck),
        cost_estimate=cost,
    )(x2, msum_rows)

    # (N*C, 3) -> (N, 3C, 1, 1):  out[n, j*C + c] = out2[n*C + c, j]
    return out2.reshape(n, c, 3).transpose(0, 2, 1).reshape(n, 3 * c, 1, 1)


def kata_value_head_gpool_reference(x, mask, mask_sum_hw):
    del mask
    sqrt_off = jnp.sqrt(mask_sum_hw) - 14.0
    layer_mean = (jnp.sum(x.astype(jnp.float32), axis=(2, 3), keepdims=True)
                  / mask_sum_hw)
    p1 = layer_mean
    p2 = layer_mean * (sqrt_off / 10.0)
    p3 = layer_mean * (sqrt_off * sqrt_off / 100.0 - 0.1)
    return jnp.concatenate([p1, p2, p3], axis=1)


if __name__ == "__main__":
    key = jax.random.PRNGKey(0)
    k_x, k_mask = jax.random.split(key, 2)

    N, C, H, W = 2, 4, 16, 16

    # Binary spatial mask (broadcast over channels), KataGo-style; activations
    # are already masked upstream, so zero them outside the mask here too.
    mask = (jax.random.uniform(k_mask, (N, 1, H, W)) > 0.2).astype(jnp.float32)
    x = jax.random.normal(k_x, (N, C, H, W), dtype=jnp.float32) * mask
    mask_sum_hw = jnp.sum(mask, axis=(2, 3), keepdims=True)   # (N, 1, 1, 1)

    out = kata_value_head_gpool(x, mask, mask_sum_hw)
    jax.block_until_ready(out)
    ref = kata_value_head_gpool_reference(x, mask, mask_sum_hw)
    assert out.shape == (N, 3 * C, 1, 1)
    assert jnp.allclose(out, ref, atol=1e-5, rtol=1e-5)

    # Exercise a multi-step grid (exact tiles) and a ragged last block, still
    # at tiny shapes.
    for n2, tile in ((16, 8), (13, 8)):
        k1, k2 = jax.random.split(jax.random.PRNGKey(n2))
        m2 = (jax.random.uniform(k2, (n2, 1, H, W)) > 0.3).astype(jnp.float32)
        x2 = jax.random.normal(k1, (n2, C, H, W), dtype=jnp.float32) * m2
        ms2 = jnp.sum(m2, axis=(2, 3), keepdims=True)
        o2 = kata_value_head_gpool(x2, m2, ms2, batch_tile=tile)
        jax.block_until_ready(o2)
        r2 = kata_value_head_gpool_reference(x2, m2, ms2)
        assert o2.shape == (n2, 3 * C, 1, 1)
        assert jnp.allclose(o2, r2, atol=1e-5, rtol=1e-5)

    print("KERNEL_OK")
</pallas_src>

<mosaic_0001>
module attributes {stable_mosaic.version = 11 : i64} {
  func.func @_gpool_kernel(%arg0: i32, %arg1: memref<8x256xf32, #tpu.memory_space<vmem>>, %arg2: memref<8x1xf32, #tpu.memory_space<vmem>>, %arg3: memref<8x3xf32, #tpu.memory_space<vmem>>) attributes {dimension_semantics = [#tpu.dimension_semantics<parallel>], iteration_bounds = array<i64: 1>, scalar_prefetch = 0 : i64, scratch_operands = 0 : i64, tpu.core_type = #tpu.core_type<tc>, window_params = [{transform_indices = @transform_0, window_bounds = array<i64: 8, 256>}, {transform_indices = @transform_1, window_bounds = array<i64: 8, 1>}, {transform_indices = @transform_2, window_bounds = array<i64: 8, 3>}]} {
    %c0 = arith.constant 0 : index
    %c0_0 = arith.constant 0 : index
    %0 = vector.load %arg1[%c0, %c0_0] : memref<8x256xf32, #tpu.memory_space<vmem>>, vector<8x256xf32>
    %cst = arith.constant dense<0.000000e+00> : vector<8xf32>
    %1 = vector.multi_reduction <add>, %0, %cst [1] : vector<8x256xf32> to vector<8xf32>
    %2 = vector.shape_cast %1 : vector<8xf32> to vector<8x1xf32>
    %c0_1 = arith.constant 0 : index
    %c0_2 = arith.constant 0 : index
    %3 = vector.load %arg2[%c0_1, %c0_2] : memref<8x1xf32, #tpu.memory_space<vmem>>, vector<8x1xf32>
    %4 = arith.divf %2, %3 : vector<8x1xf32>
    %5 = math.sqrt %3 : vector<8x1xf32>
    %cst_3 = arith.constant 1.400000e+01 : f32
    %6 = vector.broadcast %cst_3 : f32 to vector<8x1xf32>
    %7 = arith.subf %5, %6 : vector<8x1xf32>
    %cst_4 = arith.constant 1.000000e-01 : f32
    %8 = vector.broadcast %cst_4 : f32 to vector<8x1xf32>
    %9 = arith.mulf %7, %8 : vector<8x1xf32>
    %10 = arith.mulf %7, %7 : vector<8x1xf32>
    %cst_5 = arith.constant 0.00999999977 : f32
    %11 = vector.broadcast %cst_5 : f32 to vector<8x1xf32>
    %12 = arith.mulf %10, %11 : vector<8x1xf32>
    %cst_6 = arith.constant 1.000000e-01 : f32
    %13 = vector.broadcast %cst_6 : f32 to vector<8x1xf32>
    %14 = arith.subf %12, %13 : vector<8x1xf32>
    %15 = tpu.iota {dimensions = array<i32: 1>} : vector<8x3xi32>
    %c0_i32 = arith.constant 0 : i32
    %16 = vector.broadcast %c0_i32 : i32 to vector<8x3xi32>
    %17 = arith.cmpi eq, %15, %16 : vector<8x3xi32>
    %c1_i32 = arith.constant 1 : i32
    %18 = vector.broadcast %c1_i32 : i32 to vector<8x3xi32>
    %19 = arith.cmpi eq, %15, %18 : vector<8x3xi32>
    %20 = vector.shape_cast %9 : vector<8x1xf32> to vector<8x1xf32>
    %21 = vector.broadcast %20 : vector<8x1xf32> to vector<8x3xf32>
    %22 = vector.shape_cast %14 : vector<8x1xf32> to vector<8x1xf32>
    %23 = vector.broadcast %22 : vector<8x1xf32> to vector<8x3xf32>
    %24 = arith.select %19, %21, %23 : vector<8x3xi1>, vector<8x3xf32>
    %cst_7 = arith.constant 1.000000e+00 : f32
    %25 = vector.broadcast %cst_7 : f32 to vector<8x3xf32>
    %26 = arith.select %17, %25, %24 : vector<8x3xi1>, vector<8x3xf32>
    %27 = vector.broadcast %4 : vector<8x1xf32> to vector<8x3xf32>
    %28 = arith.mulf %27, %26 : vector<8x3xf32>
    %c0_8 = arith.constant 0 : index
    %c0_9 = arith.constant 0 : index
    %29 = vector.load %arg3[%c0_8, %c0_9] : memref<8x3xf32, #tpu.memory_space<vmem>>, vector<8x3xf32>
    tpu.vector_store %arg3[%c0_8, %c0_9], %28 {strides = array<i32>} : memref<8x3xf32, #tpu.memory_space<vmem>>, vector<8x3xf32>,
    return
  }
  func.func @transform_0(%arg0: i32) -> (i32, i32) {
    %c0_i32 = arith.constant 0 : i32
    %c0_i32_0 = arith.constant 0 : i32
    return %arg0, %c0_i32 : i32, i32
  }
  func.func @transform_1(%arg0: i32) -> (i32, i32) {
    %c0_i32 = arith.constant 0 : i32
    %c0_i32_0 = arith.constant 0 : i32
    return %arg0, %c0_i32 : i32, i32
  }
  func.func @transform_2(%arg0: i32) -> (i32, i32) {
    %c0_i32 = arith.constant 0 : i32
    %c0_i32_0 = arith.constant 0 : i32
    return %arg0, %c0_i32 : i32, i32
  }
}

</mosaic_0001>

<llo_original>
// kernel: tpu_custom_call.1
$region0: #{tpu_custom_call.1}
  #allocation0 [shape = 'u32[]', space=smem, size = 0x4, offset = 0x4, fixed_abs, tag = 'smem constant byte address 0x4 - core index']
  #allocation1 [shape = 'u32[144,128]{1,0:T(1,128)}', space=vmem, size = 0x12000, scoped, tag = 'internal scratch']
  %s0 = inlined_call_operand.hbm [shape: f32[8,256], index: 0, kind: input, shape index: {}]
  %s1 = inlined_call_operand.vmem [shape: f32[8,1], index: 1, kind: input, shape index: {}]
  %s2 = inlined_call_operand.vmem [shape: f32[8,3], index: 2, kind: output, shape index: {}]
  %s3 = sld [smem:[#allocation0]]
  $region22: #{tpu_custom_call.1} parent=0
    _
  %s5 = ssub.s32 1, %s3
  %s6 = scalar_select 0, %s5, %s3
  $region1: #{tpu_custom_call.1} parent=0
    #allocation2 [shape = 'u8[8192]{0}', space=vmem, size = 0x2000, scoped, tag = 'input window, operand 0, single buffered']
    #allocation3 [shape = 's32[1]{0}', space=sflag, size = 0x4, scoped, tag = 'scoped memory for tpu_custom_call.1']
    %7 = vsyncpa [#allocation3], 0
    // Predicated region
    $region2: #{tpu_custom_call.1} parent=1 // pred_check
      _
    $region3: #{tpu_custom_call.1} parent=1 // pred_check_branch
      %9 = sbr.rel (0) target = $region5
    $region4: #{tpu_custom_call.1} parent=1 // pred_region
      %s11 = ssub.s32 256, 256
      %12 = vsyncadd [#allocation3], %s11
      %s14 = sshll.u32 [#allocation2], 4
      %s15 = int_to_ptr.vmem [resolvable:$true] %s14
      %17 = dma.hbm_to_vmem [thread:$0]  %s0, 256, %s15, [#allocation3]
    $region5: #{tpu_custom_call.1} parent=1 // pred_fallthru
      _
    // Predicated region
    $region6: #{tpu_custom_call.1} parent=1 // pred_check
      _
    $region7: #{tpu_custom_call.1} parent=1 // pred_check_branch
      %19 = sbr.rel (0) target = $region9
    $region8: #{tpu_custom_call.1} parent=1 // pred_region
      _
    $region9: #{tpu_custom_call.1} parent=1 // pred_fallthru
      _
    // Predicated region
    $region10: #{tpu_custom_call.1} parent=1 // pred_check
      _
    $region11: #{tpu_custom_call.1} parent=1 // pred_check_branch
      %21 = sbr.rel (0) target = $region13
    $region12: #{tpu_custom_call.1} parent=1 // pred_region
      %22 = dma.done [#allocation3], 256
    $region13: #{tpu_custom_call.1} parent=1 // pred_fallthru
      _
    %v23 = vld [vmem:[#allocation2] sm:$0xff]
    %v24 = vld [vmem:[#allocation2 + $0x8] sm:$0xff]
    %v25 = vadd.f32 %v23, %v24
    %26 = vadd.xlane.f32.xlu0 %v25
    %v27 = vpop.xlane.xlu0 %26
    %v28 = vld [vmem:[%s1] sm:$0xff]
    %v29 = vrcp.pop %v28
    %v30 = vmul.f32 %v27, %v29
    %v31 = vrsqrt.pop %v28
    %v32 = vmul.f32 %v28, %v31
    %vm33 = vcmp.eq.f32.partialorder %v28, inf
    %v34 = vsel %vm33, %v28, %v32
    %vm35 = vcmp.eq.f32.partialorder %v28, 0.0
    %v36 = vand.u32 %v28, 2147483648
    %v37 = vsel %vm35, %v36, %v34
    %v38 = vsub.f32 %v37, 14.0
    %v39 = vmul.f32 %v38, 0.1
    %v40 = vmul.f32 %v38, %v38
    %v41 = vmul.f32 %v40, 0.01
    %v42 = vsub.f32 %v41, 0.1
    %v43 = vlaneseq
    %v44 = vand.u32 %v43, 127
    %vm45 = vcmp.eq.s32.totalorder %v44, 0
    %vm46 = vcmp.eq.s32.totalorder %v44, 1
    %48 = vset.pattern.permute.xlu0 0
    %49 = vperm.xlu0 %48, %v39
    %v50 = vpop.permute.xlu0 %49
    %53 = vset.pattern.permute.xlu0 0
    %54 = vperm.xlu0 %53, %v42
    %v55 = vpop.permute.xlu0 %54
    %v57 = vsel %vm46, %v50, %v55
    %v58 = vsel %vm45, 1.0, %v57
    %60 = vset.pattern.permute.xlu0 0
    %61 = vperm.xlu0 %60, %v30
    %v62 = vpop.permute.xlu0 %61
    %v64 = vmul.f32 %v62, %v58
    %vm65 = vcmask 23552
    %66 = vst.msk [vmem:[%s2] sm:$0xff] %vm65, %v64
    // Predicated region
    $region14: #{tpu_custom_call.1} parent=1 // pred_check
      _
    $region15: #{tpu_custom_call.1} parent=1 // pred_check_branch
      %68 = sbr.rel (0) target = $region17
    $region16: #{tpu_custom_call.1} parent=1 // pred_region
      _
    $region17: #{tpu_custom_call.1} parent=1 // pred_fallthru
      _
    // Predicated region
    $region18: #{tpu_custom_call.1} parent=1 // pred_check
      _
    $region19: #{tpu_custom_call.1} parent=1 // pred_check_branch
      %70 = sbr.rel (0) target = $region21
    $region20: #{tpu_custom_call.1} parent=1 // pred_region
      _
    $region21: #{tpu_custom_call.1} parent=1 // pred_fallthru
      _
    %71 = vsyncpa [#allocation3], 1

</llo_original>
